<compile_context>
chip_gen: v7x
topology: tpu7x:2x2x1
jax: 0.10.0
libtpu: 0.0.40
codegen_flags: <defaults>
</compile_context>

<pallas_src>
import jax
import jax.numpy as jnp
from jax.experimental import pallas as pl
from jax.experimental.pallas import tpu as pltpu


def _simplenet_kernel(x_ref, w_ref, o_ref, wsum_ref):
    # x_ref    : (B, ft)   input tile   (resident across the layer-chunk axis)
    # w_ref    : (lb, ft)  current chunk of flattened layer parameters
    # o_ref    : (B, ft)   output tile  (resident across the layer-chunk axis)
    # wsum_ref : (8, ft)   f32 per-sublane partial sums (VMEM scratch)
    lc = pl.program_id(1)

    @pl.when(lc == 0)
    def _():
        wsum_ref[...] = jnp.zeros_like(wsum_ref)

    lb, ft = w_ref.shape
    # Fold the (lb, ft) chunk into the (8, ft) accumulator: reduction over the
    # leading (non-tiled) axis lowers to elementwise vreg adds (VPU only).
    chunk = w_ref[...].astype(jnp.float32).reshape(lb // 8, 8, ft)
    wsum_ref[...] += jnp.sum(chunk, axis=0)

    # Epilogue: single 8->1 cross-sublane reduction, then add x exactly once.
    @pl.when(lc == pl.num_programs(1) - 1)
    def _():
        wsum = jnp.sum(wsum_ref[...], axis=0, keepdims=True)
        o_ref[...] = (x_ref[...] + wsum).astype(o_ref.dtype)


def _vmem_config():
    """Generation-aware (max_weight_chunk_bytes, vmem_limit_bytes)."""
    try:
        vmem_cap = int(pltpu.get_tpu_info().vmem_capacity_bytes)
    except Exception:
        vmem_cap = 64 * 1024 * 1024  # unknown -> assume smallest (v7x-class)
    if vmem_cap <= 64 * 1024 * 1024:
        # v7x-class: 64 MiB physical per TensorCore.
        return 14 << 20, 52 << 20
    # v5e / v6e: 128 MiB physical (scoped default is only 16/32 MiB -> raise).
    return 16 << 20, 80 << 20


def _choose_feature_tile(F, max_feat_tile, *, min_feat_tile, min_parallel_tiles):
    """Lane-dense (multiple of 128) feature tile dividing F.

    Prefers >= min_parallel_tiles tiles (v7x megacore) while keeping each
    weight-row DMA run >= min_feat_tile elements.
    """
    if F % 128 != 0:
        return F  # must use the full axis (block dim == array dim)
    ft = F
    while ft > max_feat_tile and ft % 256 == 0 and ft // 2 >= min_feat_tile:
        ft //= 2
    while F // ft < min_parallel_tiles and ft % 256 == 0 and ft // 2 >= min_feat_tile:
        ft //= 2
    return ft


def simplenet_forward(x, weights, *,
                      max_weight_chunk_bytes=None,
                      vmem_limit_bytes=None,
                      max_feat_tile=16384,
                      min_parallel_tiles=2):
    """x: (B, D, D); weights: (L, D, D)  ->  (B, D, D)  computing x + sum_i W_i."""
    B, D, D2 = x.shape
    assert D == D2
    L = weights.shape[0]
    F = D * D

    auto_chunk, auto_vmem = _vmem_config()
    if max_weight_chunk_bytes is None:
        max_weight_chunk_bytes = auto_chunk
    if vmem_limit_bytes is None:
        vmem_limit_bytes = auto_vmem

    x_itemsize = jnp.dtype(x.dtype).itemsize
    w_itemsize = jnp.dtype(weights.dtype).itemsize

    # Lane-dense flattened layout: last dim F = D*D.
    xf = x.reshape(B, F)
    wf = weights.reshape(L, F)

    # Feature tiling -> "parallel" grid axis.  Keep >= ~2 KiB contiguous bytes
    # per weight row in each tile so strided DMA runs stay near peak BW.
    min_feat_tile = max(128, 2048 // w_itemsize)
    ft = _choose_feature_tile(F, max_feat_tile,
                              min_feat_tile=min_feat_tile,
                              min_parallel_tiles=min_parallel_tiles)
    n_feat = F // ft

    # Layer chunking -> sequential ("arbitrary") axis: weights are the only
    # per-step streamed operand.  Budget the x/out double buffers and the
    # (8, ft) accumulator before splitting the rest over 2 weight buffers.
    sub = max(8, 32 // w_itemsize)                 # sublane multiple per dtype
    headroom = 4 << 20
    fixed = 2 * (2 * B * ft * x_itemsize) + 8 * ft * 4
    usable = max(vmem_limit_bytes - headroom - fixed, 2 * ft * w_itemsize * sub)
    per_buf = min(max_weight_chunk_bytes, usable // 2)
    lb = max(sub, (per_buf // (ft * w_itemsize) // sub) * sub)
    L_up = ((L + sub - 1) // sub) * sub            # layer count rounded to sublane
    lb = min(lb, L_up)
    n_lchunks = pl.cdiv(L, lb)
    L_pad = n_lchunks * lb
    if L_pad != L:
        wf = jnp.pad(wf, ((0, L_pad - L), (0, 0)))  # zeros are sum-neutral

    cost = pl.CostEstimate(
        flops=int(L_pad) * F + B * F,
        transcendentals=0,
        bytes_accessed=int(L_pad) * F * w_itemsize + 2 * B * F * x_itemsize,
    )

    out = pl.pallas_call(
        _simplenet_kernel,
        out_shape=jax.ShapeDtypeStruct((B, F), x.dtype),
        grid_spec=pltpu.PrefetchScalarGridSpec(
            num_scalar_prefetch=0,
            grid=(n_feat, n_lchunks),
            in_specs=[
                # x tile: same block across the layer axis -> DMA'd once/tile.
                pl.BlockSpec((B, ft), lambda j, l: (0, j)),
                # Streamed weight chunk: the only per-step HBM traffic.
                # TODO(synk): optionally sweep pipeline_mode=pl.Buffered(3).
                pl.BlockSpec((lb, ft), lambda j, l: (l, j)),
            ],
            # Output tile resident across the layer-chunk (reduction) axis.
            out_specs=pl.BlockSpec((B, ft), lambda j, l: (0, j)),
            scratch_shapes=[pltpu.VMEM((8, ft), jnp.float32)],
        ),
        compiler_params=pltpu.CompilerParams(
            dimension_semantics=("parallel", "arbitrary"),
            vmem_limit_bytes=vmem_limit_bytes,
        ),
        cost_estimate=cost,
    )(xf, wf)
    return out.reshape(B, D, D)


def init_simplenet_params(key, num_layers, dim, dtype=jnp.float32):
    """torch.normal(zeros((dim, dim)), 0.001) for each layer, stacked."""
    return jax.random.normal(key, (num_layers, dim, dim), dtype=dtype) * 0.001


def simplenet_reference(x, weights):
    out = x
    for i in range(weights.shape[0]):
        out = out + weights[i]
    return out


if __name__ == "__main__":
    key = jax.random.PRNGKey(0)
    kx1, kw1, kx2, kw2 = jax.random.split(key, 4)

    # Config 1: small default shape (batch=2, num_layers=4, dim=32).
    batch, dim = 2, 32
    x1 = jax.random.normal(kx1, (batch, dim, dim), dtype=jnp.float32)
    w1 = init_simplenet_params(kw1, 4, dim)
    out1 = jax.block_until_ready(simplenet_forward(x1, w1))
    ref1 = simplenet_reference(x1, w1)
    assert out1.shape == (batch, dim, dim)
    assert jnp.allclose(out1, ref1, atol=1e-6, rtol=1e-6)

    # Config 2: exercise multi-chunk layer accumulation + zero padding
    # (L=13 not a multiple of lb) and the multi-feature-tile path, by forcing
    # a tiny weight-chunk budget.
    x2 = jax.random.normal(kx2, (batch, dim, dim), dtype=jnp.float32)
    w2 = init_simplenet_params(kw2, 13, dim)
    out2 = jax.block_until_ready(
        simplenet_forward(x2, w2, max_weight_chunk_bytes=16 << 10))
    ref2 = simplenet_reference(x2, w2)
    assert jnp.allclose(out2, ref2, atol=1e-6, rtol=1e-6)

    print("KERNEL_OK")
</pallas_src>

<mosaic_0001>
module attributes {stable_mosaic.version = 11 : i64} {
  func.func @_simplenet_kernel(%arg0: i32, %arg1: i32, %arg2: memref<2x512xf32, #tpu.memory_space<vmem>>, %arg3: memref<8x512xf32, #tpu.memory_space<vmem>>, %arg4: memref<2x512xf32, #tpu.memory_space<vmem>>, %arg5: memref<8x512xf32, #tpu.memory_space<vmem>>) attributes {dimension_semantics = [#tpu.dimension_semantics<parallel>, #tpu.dimension_semantics<arbitrary>], iteration_bounds = array<i64: 2, 1>, scalar_prefetch = 0 : i64, scratch_operands = 1 : i64, tpu.core_type = #tpu.core_type<tc>, window_params = [{transform_indices = @transform_0, window_bounds = array<i64: 2, 512>}, {transform_indices = @transform_1, window_bounds = array<i64: 8, 512>}, {transform_indices = @transform_2, window_bounds = array<i64: 2, 512>}]} {
    %c0_i32 = arith.constant 0 : i32
    %0 = arith.cmpi eq, %arg1, %c0_i32 : i32
    %1 = arith.extui %0 : i1 to i32
    %c0_i32_0 = arith.constant 0 : i32
    %2 = arith.cmpi ne, %1, %c0_i32_0 : i32
    scf.if %2 {
      %cst_8 = arith.constant 0.000000e+00 : f32
      %12 = vector.broadcast %cst_8 : f32 to vector<8x512xf32>
      %c0_9 = arith.constant 0 : index
      %c0_10 = arith.constant 0 : index
      %13 = vector.load %arg5[%c0_9, %c0_10] : memref<8x512xf32, #tpu.memory_space<vmem>>, vector<8x512xf32>
      tpu.vector_store %arg5[%c0_9, %c0_10], %12 {strides = array<i32>} : memref<8x512xf32, #tpu.memory_space<vmem>>, vector<8x512xf32>,
    } else {
    }
    %c0 = arith.constant 0 : index
    %c0_1 = arith.constant 0 : index
    %3 = vector.load %arg3[%c0, %c0_1] : memref<8x512xf32, #tpu.memory_space<vmem>>, vector<8x512xf32>
    %4 = vector.shape_cast %3 : vector<8x512xf32> to vector<1x8x512xf32>
    %c0_2 = arith.constant 0 : index
    %c0_3 = arith.constant 0 : index
    %5 = vector.load %arg5[%c0_2, %c0_3] : memref<8x512xf32, #tpu.memory_space<vmem>>, vector<8x512xf32>
    %cst = arith.constant dense<0.000000e+00> : vector<8x512xf32>
    %6 = vector.multi_reduction <add>, %4, %cst [0] : vector<1x8x512xf32> to vector<8x512xf32>
    %7 = arith.addf %5, %6 : vector<8x512xf32>
    %c0_4 = arith.constant 0 : index
    %c0_5 = arith.constant 0 : index
    %8 = vector.load %arg5[%c0_4, %c0_5] : memref<8x512xf32, #tpu.memory_space<vmem>>, vector<8x512xf32>
    tpu.vector_store %arg5[%c0_4, %c0_5], %7 {strides = array<i32>} : memref<8x512xf32, #tpu.memory_space<vmem>>, vector<8x512xf32>,
    %c0_i32_6 = arith.constant 0 : i32
    %9 = arith.cmpi eq, %arg1, %c0_i32_6 : i32
    %10 = arith.extui %9 : i1 to i32
    %c0_i32_7 = arith.constant 0 : i32
    %11 = arith.cmpi ne, %10, %c0_i32_7 : i32
    scf.if %11 {
      %c0_8 = arith.constant 0 : index
      %c0_9 = arith.constant 0 : index
      %12 = vector.load %arg5[%c0_8, %c0_9] : memref<8x512xf32, #tpu.memory_space<vmem>>, vector<8x512xf32>
      %cst_10 = arith.constant dense<0.000000e+00> : vector<512xf32>
      %13 = vector.multi_reduction <add>, %12, %cst_10 [0] : vector<8x512xf32> to vector<512xf32>
      %14 = vector.shape_cast %13 : vector<512xf32> to vector<1x512xf32>
      %c0_11 = arith.constant 0 : index
      %c0_12 = arith.constant 0 : index
      %15 = vector.load %arg2[%c0_11, %c0_12] : memref<2x512xf32, #tpu.memory_space<vmem>>, vector<2x512xf32>
      %16 = vector.broadcast %14 : vector<1x512xf32> to vector<2x512xf32>
      %17 = arith.addf %15, %16 : vector<2x512xf32>
      %c0_13 = arith.constant 0 : index
      %c0_14 = arith.constant 0 : index
      %18 = vector.load %arg4[%c0_13, %c0_14] : memref<2x512xf32, #tpu.memory_space<vmem>>, vector<2x512xf32>
      tpu.vector_store %arg4[%c0_13, %c0_14], %17 {strides = array<i32>} : memref<2x512xf32, #tpu.memory_space<vmem>>, vector<2x512xf32>,
    } else {
    }
    return
  }
  func.func @transform_0(%arg0: i32, %arg1: i32) -> (i32, i32) {
    %c0_i32 = arith.constant 0 : i32
    %c0_i32_0 = arith.constant 0 : i32
    return %c0_i32, %arg0 : i32, i32
  }
  func.func @transform_1(%arg0: i32, %arg1: i32) -> (i32, i32) {
    %c0_i32 = arith.constant 0 : i32
    return %arg1, %arg0 : i32, i32
  }
  func.func @transform_2(%arg0: i32, %arg1: i32) -> (i32, i32) {
    %c0_i32 = arith.constant 0 : i32
    %c0_i32_0 = arith.constant 0 : i32
    return %c0_i32, %arg0 : i32, i32
  }
}

</mosaic_0001>

<llo_original>
// kernel: tpu_custom_call.1
$region0: #{tpu_custom_call.1}
  #allocation0 [shape = 'u32[]', space=smem, size = 0x4, offset = 0x4, fixed_abs, tag = 'smem constant byte address 0x4 - core index']
  #allocation1 [shape = 'u32[144,128]{1,0:T(1,128)}', space=vmem, size = 0x12000, scoped, tag = 'internal scratch']
  #allocation2 [shape = 'f32[8,512]{1,0:T(8,128)}', space=vmem, size = 0x4000, scoped, tag = 'scratch operand']
  %s0 = inlined_call_operand.hbm [shape: f32[2,1024], index: 0, kind: input, shape index: {}]
  %s1 = inlined_call_operand.hbm [shape: f32[8,1024], index: 1, kind: input, shape index: {}]
  %s2 = inlined_call_operand.hbm [shape: f32[2,1024], index: 2, kind: output, shape index: {}]
  %s3 = sld [smem:[#allocation0]]
  $region57: #{tpu_custom_call.1} parent=0
    _
  %s5 = ssub.s32 1, %s3
  %s6 = scalar_select 0, %s5, %s3
  $region1: #{tpu_custom_call.1} parent=0
    #allocation3 [shape = 'u8[8192]{0}', space=vmem, size = 0x2000, scoped, tag = 'input window, operand 0']
    #allocation4 [shape = 's32[2]{0}', space=sflag, size = 0x8, scoped, tag = 'scoped memory for tpu_custom_call.1']
    #allocation5 [shape = 's32[2]{0}', space=sflag, size = 0x8, scoped, tag = 'scoped memory for tpu_custom_call.1']
    #allocation6 [shape = 'u8[32768]{0}', space=vmem, size = 0x8000, scoped, tag = 'input window, operand 1']
    #allocation7 [shape = 's32[2]{0}', space=sflag, size = 0x8, scoped, tag = 'scoped memory for tpu_custom_call.1']
    #allocation8 [shape = 'u8[8192]{0}', space=vmem, size = 0x2000, scoped, tag = 'output window, operand 0']
    %7 = vsyncpa [#allocation4], 0
    %s8 = scalar_lea.sflag [#allocation4], 1
    %9 = vsyncpa %s8, 0
    %10 = vsyncpa [#allocation7], 0
    %s11 = scalar_lea.sflag [#allocation7], 1
    %12 = vsyncpa %s11, 0
    %13 = vsyncpa [#allocation5], 0
    %s14 = scalar_lea.sflag [#allocation5], 1
    %15 = vsyncpa %s14, 0
    loop: start=0, step=1, limit=4
    $region2: #{tpu_custom_call.1} parent=1 // loop_pre_header
      _
    $region3: #{tpu_custom_call.1} parent=1 // loop_header
      %s17 = sphi 0, %s21
      %p18 = scmp.ge.s32.totalorder %s17, 4
      %s24 = sphi 0, %s36
      %s25 = sphi 0, %s32
      %s26 = sphi 0, %s24
      %s27 = sphi 0, %s25
      %s28 = sphi 0, %s26
      %s29 = sphi 0, %s27
      %s39 = sphi 0, %s41
      %s42 = sphi 0, %s39
      %s43 = sphi 0, %s42
      %s59 = sphi 0, %s43
      %s67 = sphi 0, %s69
      %s70 = sphi 0, %s67
      %s71 = sphi 0, %s70
      %s87 = sphi 0, %s71
      %s93 = sphi 0, %s95
      %s96 = sphi 0, %s93
      %s97 = sphi 0, %s96
      %s113 = sphi 0, %s97
    $region4: #{tpu_custom_call.1} parent=1 // loop_header_branch
      %20 = sbr.rel (%p18) target = $region8
    $region5: #{tpu_custom_call.1} parent=1 // loop_body
      %s22 = ssub.s32 %s17, 1
      %s23 = ssub.s32 %s17, 2
      %s30 = sadd.s32 1, %s25
      %p31 = scmp.ge.s32.totalorder %s30, 1
      %s32 = scalar_select %p31, 0, %s30
      %s33 = sadd.s32 1, %s24
      %s34 = scalar_select %p31, %s33, %s24
      %p35 = scmp.ge.s32.totalorder %s34, 2
      %s36 = scalar_select %p35, 0, %s34
      %s37 = ssub.s32 %s24, %s36
      %p38 = scmp.eq.s32.totalorder %s37, 0
      %s40 = sadd.s32 %s39, 1
      %s41 = scalar_select %p38, %s39, %s40
      %p44 = pneg %p38
      %p45 = scmp.eq.s32.totalorder %s17, 1
      %p46 = por %p44, %p45
      %p47 = scmp.ne.s32.totalorder %s39, %s42
      %p48 = scmp.eq.s32.totalorder %s17, 0
      %p49 = por %p47, %p48
      %p50 = scmp.ne.s32.totalorder %s39, %s42
      %p51 = scmp.eq.s32.totalorder %s22, 1
      %p52 = por %p50, %p51
      %p53 = scmp.ne.s32.totalorder %s42, %s43
      %p54 = scmp.eq.s32.totalorder %s22, 0
      %p55 = por %p53, %p54
      %p56 = scmp.ne.s32.totalorder %s42, %s43
      %p57 = scmp.eq.s32.totalorder %s23, 1
      %p58 = por %p56, %p57
      %p60 = scmp.ne.s32.totalorder %s43, %s59
      %p61 = scmp.eq.s32.totalorder %s23, 0
      %p62 = por %p60, %p61
      %s63 = ssub.s32 %s25, %s32
      %s64 = ssub.s32 %s24, %s36
      %s65 = sor.u32 %s63, %s64
      %p66 = scmp.eq.s32.totalorder %s65, 0
      %s68 = sadd.s32 %s67, 1
      %s69 = scalar_select %p66, %s67, %s68
      %p72 = pneg %p66
      %p73 = scmp.eq.s32.totalorder %s17, 1
      %p74 = por %p72, %p73
      %p75 = scmp.ne.s32.totalorder %s67, %s70
      %p76 = scmp.eq.s32.totalorder %s17, 0
      %p77 = por %p75, %p76
      %p78 = scmp.ne.s32.totalorder %s67, %s70
      %p79 = scmp.eq.s32.totalorder %s22, 1
      %p80 = por %p78, %p79
      %p81 = scmp.ne.s32.totalorder %s70, %s71
      %p82 = scmp.eq.s32.totalorder %s22, 0
      %p83 = por %p81, %p82
      %p84 = scmp.ne.s32.totalorder %s70, %s71
      %p85 = scmp.eq.s32.totalorder %s23, 1
      %p86 = por %p84, %p85
      %p88 = scmp.ne.s32.totalorder %s71, %s87
      %p89 = scmp.eq.s32.totalorder %s23, 0
      %p90 = por %p88, %p89
      %s91 = ssub.s32 %s24, %s36
      %p92 = scmp.eq.s32.totalorder %s91, 0
      %s94 = sadd.s32 %s93, 1
      %s95 = scalar_select %p92, %s93, %s94
      %p98 = pneg %p92
      %p99 = scmp.eq.s32.totalorder %s17, 1
      %p100 = por %p98, %p99
      %p101 = scmp.ne.s32.totalorder %s93, %s96
      %p102 = scmp.eq.s32.totalorder %s17, 0
      %p103 = por %p101, %p102
      %p104 = scmp.ne.s32.totalorder %s93, %s96
      %p105 = scmp.eq.s32.totalorder %s22, 1
      %p106 = por %p104, %p105
      %p107 = scmp.ne.s32.totalorder %s96, %s97
      %p108 = scmp.eq.s32.totalorder %s22, 0
      %p109 = por %p107, %p108
      %p110 = scmp.ne.s32.totalorder %s96, %s97
      %p111 = scmp.eq.s32.totalorder %s23, 1
      %p112 = por %p110, %p111
      %p114 = scmp.ne.s32.totalorder %s97, %s113
      %p115 = scmp.eq.s32.totalorder %s23, 0
      %p116 = por %p114, %p115
      %p117 = scmp.le.s32.totalorder 1, %s17
      %p118 = scmp.lt.s32.totalorder %s17, 3
      %p119 = pnand %p117, %p118
      %p120 = pneg %p119
      // Predicated region
      $region9: #{tpu_custom_call.1} parent=5 // pred_check
        _
      $region10: #{tpu_custom_call.1} parent=5 // pred_check_branch
        %122 = sbr.rel (%p119) target = $region12
      $region11: #{tpu_custom_call.1} parent=5 // pred_region
        %s123 = ssub.s32 %s17, 1
      $region12: #{tpu_custom_call.1} parent=5 // pred_fallthru
        _
      %p124 = scmp.lt.s32.totalorder %s17, 2
      // Predicated region
      $region13: #{tpu_custom_call.1} parent=5 // pred_check
        %p125 = pneg %p124
      $region14: #{tpu_custom_call.1} parent=5 // pred_check_branch
        %127 = sbr.rel (%p125) target = $region16
      $region15: #{tpu_custom_call.1} parent=5 // pred_region
        // Predicated region
        $region17: #{tpu_custom_call.1} parent=15 // pred_check
          %p128 = pneg %p49
        $region18: #{tpu_custom_call.1} parent=15 // pred_check_branch
          %130 = sbr.rel (%p128) target = $region20
        $region19: #{tpu_custom_call.1} parent=15 // pred_region
          %s131 = sand.u32 %s39, 1
          %s132 = scalar_lea.sflag [#allocation4], %s131
          %s133 = sand.u32 %s39, 1
          %s134 = smul.addr %s133, 8
          %s135 = scalar_lea.vmem [#allocation3], %s134
          %s136 = smul.u32 4, %s24
          %s138 = ssub.s32 128, 128
          %139 = vsyncadd %s132, %s138
          %s140 = smul.addr %s136, 32
          %s141 = scalar_lea.hbm %s0, %s140
          %s143 = sshll.u32 %s135, 4
          %s144 = int_to_ptr.vmem [resolvable:$true] %s143
          %146 = dma.hbm_to_vmem [thread:$0]  %s141, 128, %s144, %s132
        $region20: #{tpu_custom_call.1} parent=15 // pred_fallthru
          _
        // Predicated region
        $region21: #{tpu_custom_call.1} parent=15 // pred_check
          %p147 = pneg %p77
        $region22: #{tpu_custom_call.1} parent=15 // pred_check_branch
          %149 = sbr.rel (%p147) target = $region24
        $region23: #{tpu_custom_call.1} parent=15 // pred_region
          %s150 = sand.u32 %s67, 1
          %s151 = scalar_lea.sflag [#allocation7], %s150
          %s152 = sand.u32 %s67, 1
          %s153 = smul.addr %s152, 32
          %s154 = scalar_lea.vmem [#allocation6], %s153
          %s155 = smul.u32 4, %s24
          %s157 = ssub.s32 512, 512
          %158 = vsyncadd %s151, %s157
          %s159 = smul.addr %s25, 8
          %s160 = sadd.s32 %s155, %s159
          %s161 = smul.addr %s160, 128
          %s162 = scalar_lea.hbm %s1, %s161
          %s164 = sshll.u32 %s154, 4
          %s165 = int_to_ptr.vmem [resolvable:$true] %s164
          %167 = dma.hbm_to_vmem [thread:$0]  %s162, 512, %s165, %s151
        $region24: #{tpu_custom_call.1} parent=15 // pred_fallthru
          _
      $region16: #{tpu_custom_call.1} parent=5 // pred_fallthru
        _
      %p168 = scmp.le.s32.totalorder 1, %s17
      %p169 = scmp.lt.s32.totalorder %s17, 3
      %p170 = pnand %p168, %p169
      %p171 = pneg %p170
      // Predicated region
      $region25: #{tpu_custom_call.1} parent=5 // pred_check
        _
      $region26: #{tpu_custom_call.1} parent=5 // pred_check_branch
        %173 = sbr.rel (%p170) target = $region28
      $region27: #{tpu_custom_call.1} parent=5 // pred_region
        %s174 = ssub.s32 %s17, 1
        %s175 = sand.u32 %s42, 1
        %s176 = scalar_lea.sflag [#allocation4], %s175
        %s177 = sand.u32 %s42, 1
        %s178 = smul.addr %s177, 8
        %s179 = scalar_lea.vmem [#allocation3], %s178
        // Predicated region
        $region29: #{tpu_custom_call.1} parent=27 // pred_check
          %p180 = pneg %p55
        $region30: #{tpu_custom_call.1} parent=27 // pred_check_branch
          %182 = sbr.rel (%p180) target = $region32
        $region31: #{tpu_custom_call.1} parent=27 // pred_region
          %183 = dma.done %s176, 128
        $region32: #{tpu_custom_call.1} parent=27 // pred_fallthru
          _
        %s184 = sand.u32 %s70, 1
        %s185 = scalar_lea.sflag [#allocation7], %s184
        %s186 = sand.u32 %s70, 1
        %s187 = smul.addr %s186, 32
        %s188 = scalar_lea.vmem [#allocation6], %s187
        // Predicated region
        $region33: #{tpu_custom_call.1} parent=27 // pred_check
          %p189 = pneg %p83
        $region34: #{tpu_custom_call.1} parent=27 // pred_check_branch
          %191 = sbr.rel (%p189) target = $region36
        $region35: #{tpu_custom_call.1} parent=27 // pred_region
          %192 = dma.done %s185, 512
        $region36: #{tpu_custom_call.1} parent=27 // pred_fallthru
          _
        %s193 = sand.u32 %s42, 1
        %s194 = scalar_lea.sflag [#allocation4], %s193
        %s195 = sand.u32 %s42, 1
        %s196 = smul.addr %s195, 8
        %s197 = scalar_lea.vmem [#allocation3], %s196
        %p198 = pneg %p55
        %p199 = pneg %p52
        %s200 = sand.u32 %s70, 1
        %s201 = scalar_lea.sflag [#allocation7], %s200
        %s202 = sand.u32 %s70, 1
        %s203 = smul.addr %s202, 32
        %s204 = scalar_lea.vmem [#allocation6], %s203
        %p205 = pneg %p83
        %p206 = pneg %p80
        %p207 = pneg %p109
        %p208 = pneg %p106
        %s209 = sand.u32 %s96, 1
        %s210 = scalar_lea.sflag [#allocation5], %s209
        %s211 = sand.u32 %s96, 1
        %s212 = smul.addr %s211, 8
        %s213 = scalar_lea.vmem [#allocation8], %s212
        %s214 = smul.u32 4, %s26
        %s215 = smul.u32 4, %s26
        %s216 = smul.u32 4, %s26
        %p217 = scmp.eq.s32.totalorder %s27, 0
        // Predicated region
        $region37: #{tpu_custom_call.1} parent=27 // pred_check
          %p218 = pneg %p217
        $region38: #{tpu_custom_call.1} parent=27 // pred_check_branch
          %220 = sbr.rel (%p218) target = $region40
        $region39: #{tpu_custom_call.1} parent=27 // pred_region
          %221 = vst [vmem:[#allocation2] sm:$0xff] 0.0
          %222 = vst [vmem:[#allocation2 + $0x8] sm:$0xff] 0.0
          %223 = vst [vmem:[#allocation2 + $0x10] sm:$0xff] 0.0
          %224 = vst [vmem:[#allocation2 + $0x18] sm:$0xff] 0.0
        $region40: #{tpu_custom_call.1} parent=27 // pred_fallthru
          _
        %v225 = vld [vmem:[%s188] sm:$0xff]
        %v226 = vld [vmem:[%s188 + $0x8] sm:$0xff]
        %v227 = vld [vmem:[%s188 + $0x10] sm:$0xff]
        %v228 = vld [vmem:[%s188 + $0x18] sm:$0xff]
        %v229 = vld [vmem:[#allocation2] sm:$0xff]
        %v230 = vld [vmem:[#allocation2 + $0x8] sm:$0xff]
        %v231 = vld [vmem:[#allocation2 + $0x10] sm:$0xff]
        %v232 = vld [vmem:[#allocation2 + $0x18] sm:$0xff]
        %v233 = vadd.f32 %v225, 0.0
        %v234 = vadd.f32 %v226, 0.0
        %v235 = vadd.f32 %v227, 0.0
        %v236 = vadd.f32 %v228, 0.0
        %v237 = vadd.f32 %v229, %v233
        %v238 = vadd.f32 %v230, %v234
        %v239 = vadd.f32 %v231, %v235
        %v240 = vadd.f32 %v232, %v236
        %241 = vst [vmem:[#allocation2] sm:$0xff] %v237
        %242 = vst [vmem:[#allocation2 + $0x8] sm:$0xff] %v238
        %243 = vst [vmem:[#allocation2 + $0x10] sm:$0xff] %v239
        %244 = vst [vmem:[#allocation2 + $0x18] sm:$0xff] %v240
        // Predicated region
        $region41: #{tpu_custom_call.1} parent=27 // pred_check
          %p245 = pneg %p217
        $region42: #{tpu_custom_call.1} parent=27 // pred_check_branch
          %247 = sbr.rel (%p245) target = $region44
        $region43: #{tpu_custom_call.1} parent=27 // pred_region
          %v248 = vld [vmem:[#allocation2] sm:$0xff]
          %v249 = vld [vmem:[#allocation2 + $0x8] sm:$0xff]
          %v250 = vld [vmem:[#allocation2 + $0x10] sm:$0xff]
          %v251 = vld [vmem:[#allocation2 + $0x18] sm:$0xff]
          %v252 = vrot.slane %v248, 4
          %v253 = vadd.f32 %v248, %v252
          %v254 = vrot.slane %v253, 2
          %v255 = vadd.f32 %v253, %v254
          %v256 = vrot.slane %v255, 1
          %v257 = vadd.f32 %v255, %v256
          %v258 = vrot.slane %v249, 4
          %v259 = vadd.f32 %v249, %v258
          %v260 = vrot.slane %v259, 2
          %v261 = vadd.f32 %v259, %v260
          %v262 = vrot.slane %v261, 1
          %v263 = vadd.f32 %v261, %v262
          %v264 = vrot.slane %v250, 4
          %v265 = vadd.f32 %v250, %v264
          %v266 = vrot.slane %v265, 2
          %v267 = vadd.f32 %v265, %v266
          %v268 = vrot.slane %v267, 1
          %v269 = vadd.f32 %v267, %v268
          %v270 = vrot.slane %v251, 4
          %v271 = vadd.f32 %v251, %v270
          %v272 = vrot.slane %v271, 2
          %v273 = vadd.f32 %v271, %v272
          %v274 = vrot.slane %v273, 1
          %v275 = vadd.f32 %v273, %v274
          %v276 = vld [vmem:[%s179] sm:$0xff]
          %v281 = vcombine.low %v257, %v263
          %v282 = vcombine.low %v269, %v275
          %v284 = vunpack.c.l.s4 1983009808
          %v285 = vunpack.c.0.s8 %v284
          %v286 = vlaneseq
          %v287 = vshrl.u32 %v286, 7
          %v288 = vsub.s32 %v285, %v287
          %v289 = vrot.slane %v281, %v288
          %v291 = vunpack.c.l.s4 1983009808
          %v292 = vunpack.c.0.s8 %v291
          %v293 = vlaneseq
          %v294 = vshrl.u32 %v293, 7
          %v295 = vsub.s32 %v292, %v294
          %v296 = vrot.slane %v282, %v295
          %v297 = vcombine.low %v289, %v296
          %v299 = vadd.f32 %v276, %v297
          %300 = vst [vmem:[%s213] sm:$0xff] %v299
        $region44: #{tpu_custom_call.1} parent=27 // pred_fallthru
          _
        %s301 = sand.u32 %s96, 1
        %s302 = scalar_lea.sflag [#allocation5], %s301
        %s303 = sand.u32 %s96, 1
        %s304 = smul.addr %s303, 8
        %s305 = scalar_lea.vmem [#allocation8], %s304
        // Predicated region
        $region45: #{tpu_custom_call.1} parent=27 // pred_check
          %p306 = pneg %p106
        $region46: #{tpu_custom_call.1} parent=27 // pred_check_branch
          %308 = sbr.rel (%p306) target = $region48
        $region47: #{tpu_custom_call.1} parent=27 // pred_region
          %s309 = smul.u32 4, %s26
          %s311 = ssub.s32 128, 128
          %312 = vsyncadd %s302, %s311
          %s313 = smul.addr %s309, 32
          %s314 = scalar_lea.hbm %s2, %s313
          %s316 = sshll.u32 %s305, 4
          %s317 = int_to_ptr.vmem [resolvable:$true] %s316
          %319 = dma.vmem_to_hbm [thread:$0]  %s317, 128, %s314, %s302
        $region48: #{tpu_custom_call.1} parent=27 // pred_fallthru
          _
      $region28: #{tpu_custom_call.1} parent=5 // pred_fallthru
        _
      %p320 = scmp.le.s32.totalorder 2, %s17
      // Predicated region
      $region49: #{tpu_custom_call.1} parent=5 // pred_check
        %p321 = pneg %p320
      $region50: #{tpu_custom_call.1} parent=5 // pred_check_branch
        %323 = sbr.rel (%p321) target = $region52
      $region51: #{tpu_custom_call.1} parent=5 // pred_region
        %s324 = ssub.s32 %s17, 2
        // Predicated region
        $region53: #{tpu_custom_call.1} parent=51 // pred_check
          %p325 = pneg %p112
        $region54: #{tpu_custom_call.1} parent=51 // pred_check_branch
          %327 = sbr.rel (%p325) target = $region56
        $region55: #{tpu_custom_call.1} parent=51 // pred_region
          %s328 = sand.u32 %s97, 1
          %s329 = scalar_lea.sflag [#allocation5], %s328
          %s330 = sand.u32 %s97, 1
          %s331 = smul.addr %s330, 8
          %s332 = scalar_lea.vmem [#allocation8], %s331
          %333 = dma.done %s329, 128
        $region56: #{tpu_custom_call.1} parent=51 // pred_fallthru
          _
      $region52: #{tpu_custom_call.1} parent=5 // pred_fallthru
        _
    $region6: #{tpu_custom_call.1} parent=1 // loop_footer
      %s21 = sadd.s32 1, %s17
    $region7: #{tpu_custom_call.1} parent=1 // loop_footer_branch
      %16 = sbr.rel target = $region3
    $region8: #{tpu_custom_call.1} parent=1 // loop_exit
      _
    %334 = vsyncpa [#allocation4], 1
    %s335 = scalar_lea.sflag [#allocation4], 1
    %336 = vsyncpa %s335, 1
    %337 = vsyncpa [#allocation7], 1
    %s338 = scalar_lea.sflag [#allocation7], 1
    %339 = vsyncpa %s338, 1
    %340 = vsyncpa [#allocation5], 1
    %s341 = scalar_lea.sflag [#allocation5], 1
    %342 = vsyncpa %s341, 1

</llo_original>
